<compile_context>
chip_gen: v7x
topology: tpu7x:2x2x1
jax: 0.10.0
libtpu: 0.0.40
codegen_flags: <defaults>
</compile_context>

<pallas_src>
import jax
import jax.numpy as jnp
from jax import lax
from jax.experimental import pallas as pl
from jax.experimental.pallas import tpu as pltpu

_DEFAULT_TILE_R = 512  # rows of 128 lanes per spatial tile (~1 MiB/block @ C=4 f32)


def _round_up(x, m):
    return ((x + m - 1) // m) * m


def _pick_tile_r(R, N, default=_DEFAULT_TILE_R):
    """Row-tile size: multiple of 8 (or == R), big, and >=2 grid steps if N==1."""
    if R <= default:
        tile_r = R
        if N == 1 and R > 8:
            # v7x has 2 TensorCores; keep at least 2 'parallel' grid steps.
            half = _round_up((R + 1) // 2, 8)
            if half < R:
                tile_r = half
        return tile_r
    return default  # already a multiple of 8


def _channel_sq_sum(x, C):
    """Sum of squares over the channel (leading) axis of (C, tile_r, 128).

    Unrolled for small C (normals: C=3/4): a short VALU chain over full-vreg
    (tile_r, 128) slabs.
    """
    if C <= 8:
        sq = x[0] * x[0]
        for c in range(1, C):
            sq = sq + x[c] * x[c]
        return sq
    return jnp.sum(x * x, axis=0)


# ---------------------------------------------------------------------------
# Standalone Normalize kernel
# ---------------------------------------------------------------------------
def _make_normalize_kernel(C):
    def kernel(x_ref, o_ref):
        x = x_ref[...].astype(jnp.float32)                 # (C, tile_r, 128)
        inv = lax.rsqrt(_channel_sq_sum(x, C) + 1e-24)     # EUP; eps^2 keeps 0->0
        o_ref[...] = (x * inv).astype(o_ref.dtype)
    return kernel


def normalize(x, *, tile_r=_DEFAULT_TILE_R):
    """x: (N, C, H, W) -> x / (||x||_2 along dim=1 + 1e-12)."""
    N, C, H, W = x.shape
    S = H * W
    S128 = _round_up(S, 128)
    x_flat = x.reshape(N, C, S)
    if S128 != S:
        # Only the lane remainder (< 128 elems/row) needs padding; typical image
        # sizes (H*W % 128 == 0) skip this copy entirely.
        x_flat = jnp.pad(x_flat, ((0, 0), (0, 0), (0, S128 - S)))
    R = S128 // 128
    x4 = x_flat.reshape(N, C, R, 128)

    tr = _pick_tile_r(R, N, tile_r)
    num_r = pl.cdiv(R, tr)
    itemsize = jnp.dtype(x.dtype).itemsize
    cost = pl.CostEstimate(flops=3 * N * C * S, transcendentals=N * S,
                           bytes_accessed=2 * N * C * S * itemsize)

    out4 = pl.pallas_call(
        _make_normalize_kernel(C),
        out_shape=jax.ShapeDtypeStruct((N, C, R, 128), x.dtype),
        grid_spec=pltpu.PrefetchScalarGridSpec(
            num_scalar_prefetch=0,
            grid=(N, num_r),
            in_specs=[pl.BlockSpec((pl.Squeezed(), C, tr, 128),
                                   lambda n, r: (n, 0, r, 0))],
            out_specs=pl.BlockSpec((pl.Squeezed(), C, tr, 128),
                                   lambda n, r: (n, 0, r, 0)),
        ),
        compiler_params=pltpu.CompilerParams(
            dimension_semantics=("parallel", "parallel")),
        cost_estimate=cost,
    )(x4)

    out_flat = out4.reshape(N, C, S128)
    if S128 != S:
        out_flat = out_flat[:, :, :S]
    return out_flat.reshape(N, C, H, W)


# ---------------------------------------------------------------------------
# Fused NormalsLoss kernel: (optional normalize) + ignore-mask + L1/L2 partials
# ---------------------------------------------------------------------------
def _make_loss_kernel(C, do_normalize, norm, ignore_value, R, tile_r):
    ragged = (R % tile_r) != 0  # last row-tile overruns R -> mask garbage rows

    def kernel(out_ref, lab_ref, loss_ref, cnt_ref):
        x = out_ref[...].astype(jnp.float32)               # (C, tile_r, 128)
        lab = lab_ref[...].astype(jnp.float32)
        if do_normalize:
            inv = lax.rsqrt(_channel_sq_sum(x, C) + 1e-24)  # EUP; zero-vec -> 0
            x = x * inv
        # Exact float equality with ignore_value mirrors the PyTorch reference.
        mask = lab != ignore_value
        if ragged:
            rows = lax.broadcasted_iota(jnp.int32, (tile_r, 128), 0)
            mask = mask & ((pl.program_id(1) * tile_r + rows) < R)
        diff = jnp.where(mask, x - lab, 0.0)
        per = jnp.abs(diff) if norm == 1 else diff * diff
        loss_ref[...] = jnp.sum(jnp.sum(per, axis=0), keepdims=True)
        cnt_ref[...] = jnp.sum(jnp.sum(mask.astype(jnp.float32), axis=0),
                               keepdims=True)
    return kernel


def _normals_loss_partials(out, label, *, do_normalize, norm, ignore_value,
                           tile_r=_DEFAULT_TILE_R):
    N, C, H, W = out.shape
    S = H * W
    S128 = _round_up(S, 128)
    out_flat = out.reshape(N, C, S)
    lab_flat = label.reshape(N, C, S)
    if S128 != S:
        pad = ((0, 0), (0, 0), (0, S128 - S))
        out_flat = jnp.pad(out_flat, pad)
        # label pad carries the ignore value -> excluded from loss and count
        lab_flat = jnp.pad(lab_flat, pad, constant_values=ignore_value)
    R = S128 // 128
    out4 = out_flat.reshape(N, C, R, 128)
    lab4 = lab_flat.reshape(N, C, R, 128)

    tr = _pick_tile_r(R, N, tile_r)
    num_r = pl.cdiv(R, tr)
    itemsize = jnp.dtype(out.dtype).itemsize
    cost = pl.CostEstimate(
        flops=(7 if do_normalize else 4) * N * C * S,
        transcendentals=(N * S) if do_normalize else 0,
        bytes_accessed=2 * N * C * S * itemsize)

    part_loss, part_cnt = pl.pallas_call(
        _make_loss_kernel(C, do_normalize, norm, float(ignore_value), R, tr),
        out_shape=(jax.ShapeDtypeStruct((N, num_r, 1, 1), jnp.float32),
                   jax.ShapeDtypeStruct((N, num_r, 1, 1), jnp.float32)),
        grid_spec=pltpu.PrefetchScalarGridSpec(
            num_scalar_prefetch=0,
            grid=(N, num_r),
            in_specs=[
                pl.BlockSpec((pl.Squeezed(), C, tr, 128),
                             lambda n, r: (n, 0, r, 0)),
                pl.BlockSpec((pl.Squeezed(), C, tr, 128),
                             lambda n, r: (n, 0, r, 0)),
            ],
            out_specs=(
                pl.BlockSpec((pl.Squeezed(), pl.Squeezed(), 1, 1),
                             lambda n, r: (n, r, 0, 0)),
                pl.BlockSpec((pl.Squeezed(), pl.Squeezed(), 1, 1),
                             lambda n, r: (n, r, 0, 0)),
            ),
        ),
        compiler_params=pltpu.CompilerParams(
            dimension_semantics=("parallel", "parallel")),
        cost_estimate=cost,
    )(out4, lab4)

    return jnp.sum(part_loss), jnp.sum(part_cnt)


class NormalsLoss:
    """Pallas port of the PyTorch NormalsLoss module (forward pass only)."""

    def __init__(self, size_average=True, normalize=False, norm=1):
        self.size_average = size_average
        self.do_normalize = normalize
        if norm not in (1, 2):
            raise NotImplementedError
        self.norm = norm

    def __call__(self, out, label, ignore_label=255):
        loss, n_valid = _normals_loss_partials(
            out, label, do_normalize=self.do_normalize, norm=self.norm,
            ignore_value=float(ignore_label))
        # TODO(synk): PyTorch does n_valid.item() (host sync); here n_valid stays
        # a traced device scalar, numerically identical.
        if self.size_average:
            if ignore_label:
                # PyTorch truthiness quirk preserved: ignore_label=0 falls through
                # to the numel divisor below.
                return loss / jnp.maximum(n_valid, 1e-6)
            return loss / float(label.size)
        return loss


if __name__ == "__main__":
    key = jax.random.PRNGKey(0)

    # --- pure-JAX reference mirroring the PyTorch module ---
    def ref_normalize(x):
        qn = jnp.sqrt(jnp.sum(x * x, axis=1, keepdims=True)) + 1e-12
        return x / qn

    def ref_loss(o, l, *, normalize_flag, norm, ignore_label=255):
        mask = l != ignore_label
        n_valid = jnp.sum(mask).astype(jnp.float32)
        on = ref_normalize(o) if normalize_flag else o
        d = jnp.where(mask, on - l, 0.0)
        loss = jnp.sum(jnp.abs(d)) if norm == 1 else jnp.sum(d * d)
        return loss / jnp.maximum(n_valid, 1e-6)

    def make_inputs(k, shape):
        k1, k2, k3 = jax.random.split(k, 3)
        o = jax.random.normal(k1, shape, dtype=jnp.float32)
        lv = jax.random.normal(k2, shape, dtype=jnp.float32)
        ig = jax.random.bernoulli(k3, 0.3, shape)
        return o, jnp.where(ig, jnp.float32(255.0), lv)

    # Case A: N=2, C=4, 16x16 (S divisible by 128, no padding, no ragged tile)
    kA, kB = jax.random.split(key)
    outA, labA = make_inputs(kA, (2, 4, 16, 16))

    nrmA = jax.block_until_ready(normalize(outA))
    assert jnp.allclose(nrmA, ref_normalize(outA), atol=1e-4, rtol=1e-4), \
        "normalize mismatch (case A)"

    lossA = jax.block_until_ready(NormalsLoss()(outA, labA))
    assert jnp.allclose(lossA, ref_loss(outA, labA, normalize_flag=False, norm=1),
                        atol=1e-4, rtol=1e-4), "loss (no normalize) mismatch"

    lossA_n = jax.block_until_ready(NormalsLoss(normalize=True)(outA, labA))
    assert jnp.allclose(lossA_n, ref_loss(outA, labA, normalize_flag=True, norm=1),
                        atol=1e-4, rtol=1e-4), "loss (normalize) mismatch"

    lossA_2 = jax.block_until_ready(NormalsLoss(norm=2)(outA, labA))
    assert jnp.allclose(lossA_2, ref_loss(outA, labA, normalize_flag=False, norm=2),
                        atol=1e-4, rtol=1e-4), "loss (L2) mismatch"

    # Case B: N=1, C=3, 36x36 (exercises lane pad, ragged row tile, N==1 split)
    outB, labB = make_inputs(kB, (1, 3, 36, 36))

    nrmB = jax.block_until_ready(normalize(outB))
    assert jnp.allclose(nrmB, ref_normalize(outB), atol=1e-4, rtol=1e-4), \
        "normalize mismatch (case B)"

    lossB = jax.block_until_ready(NormalsLoss(normalize=True)(outB, labB))
    assert jnp.allclose(lossB, ref_loss(outB, labB, normalize_flag=True, norm=1),
                        atol=1e-4, rtol=1e-4), "loss (case B) mismatch"

    print("KERNEL_OK")
</pallas_src>

<mosaic_0001>
module attributes {stable_mosaic.version = 11 : i64} {
  func.func @kernel(%arg0: i32, %arg1: i32, %arg2: memref<1x4x2x128xf32, #tpu.memory_space<vmem>>, %arg3: memref<1x4x2x128xf32, #tpu.memory_space<vmem>>) attributes {dimension_semantics = [#tpu.dimension_semantics<parallel>, #tpu.dimension_semantics<parallel>], iteration_bounds = array<i64: 2, 1>, scalar_prefetch = 0 : i64, scratch_operands = 0 : i64, tpu.core_type = #tpu.core_type<tc>, window_params = [{transform_indices = @transform_0, window_bounds = array<i64: 1, 4, 2, 128>}, {transform_indices = @transform_1, window_bounds = array<i64: 1, 4, 2, 128>}]} {
    %c0 = arith.constant 0 : index
    %c0_0 = arith.constant 0 : index
    %c0_1 = arith.constant 0 : index
    %c0_2 = arith.constant 0 : index
    %0 = vector.load %arg2[%c0, %c0_0, %c0_1, %c0_2] : memref<1x4x2x128xf32, #tpu.memory_space<vmem>>, vector<1x4x2x128xf32>
    %1 = vector.shape_cast %0 : vector<1x4x2x128xf32> to vector<4x2x128xf32>
    %2 = vector.extract_strided_slice %1 {offsets = [0, 0, 0], sizes = [1, 2, 128], strides = [1, 1, 1]} : vector<4x2x128xf32> to vector<1x2x128xf32>
    %3 = vector.shape_cast %2 : vector<1x2x128xf32> to vector<2x128xf32>
    %4 = vector.extract_strided_slice %1 {offsets = [0, 0, 0], sizes = [1, 2, 128], strides = [1, 1, 1]} : vector<4x2x128xf32> to vector<1x2x128xf32>
    %5 = vector.shape_cast %4 : vector<1x2x128xf32> to vector<2x128xf32>
    %6 = arith.mulf %3, %5 : vector<2x128xf32>
    %7 = vector.extract_strided_slice %1 {offsets = [1, 0, 0], sizes = [1, 2, 128], strides = [1, 1, 1]} : vector<4x2x128xf32> to vector<1x2x128xf32>
    %8 = vector.shape_cast %7 : vector<1x2x128xf32> to vector<2x128xf32>
    %9 = vector.extract_strided_slice %1 {offsets = [1, 0, 0], sizes = [1, 2, 128], strides = [1, 1, 1]} : vector<4x2x128xf32> to vector<1x2x128xf32>
    %10 = vector.shape_cast %9 : vector<1x2x128xf32> to vector<2x128xf32>
    %11 = arith.mulf %8, %10 : vector<2x128xf32>
    %12 = arith.addf %6, %11 : vector<2x128xf32>
    %13 = vector.extract_strided_slice %1 {offsets = [2, 0, 0], sizes = [1, 2, 128], strides = [1, 1, 1]} : vector<4x2x128xf32> to vector<1x2x128xf32>
    %14 = vector.shape_cast %13 : vector<1x2x128xf32> to vector<2x128xf32>
    %15 = vector.extract_strided_slice %1 {offsets = [2, 0, 0], sizes = [1, 2, 128], strides = [1, 1, 1]} : vector<4x2x128xf32> to vector<1x2x128xf32>
    %16 = vector.shape_cast %15 : vector<1x2x128xf32> to vector<2x128xf32>
    %17 = arith.mulf %14, %16 : vector<2x128xf32>
    %18 = arith.addf %12, %17 : vector<2x128xf32>
    %19 = vector.extract_strided_slice %1 {offsets = [3, 0, 0], sizes = [1, 2, 128], strides = [1, 1, 1]} : vector<4x2x128xf32> to vector<1x2x128xf32>
    %20 = vector.shape_cast %19 : vector<1x2x128xf32> to vector<2x128xf32>
    %21 = vector.extract_strided_slice %1 {offsets = [3, 0, 0], sizes = [1, 2, 128], strides = [1, 1, 1]} : vector<4x2x128xf32> to vector<1x2x128xf32>
    %22 = vector.shape_cast %21 : vector<1x2x128xf32> to vector<2x128xf32>
    %23 = arith.mulf %20, %22 : vector<2x128xf32>
    %24 = arith.addf %18, %23 : vector<2x128xf32>
    %cst = arith.constant 1.000000e-24 : f32
    %25 = vector.broadcast %cst : f32 to vector<2x128xf32>
    %26 = arith.addf %24, %25 : vector<2x128xf32>
    %27 = math.rsqrt %26 : vector<2x128xf32>
    %28 = vector.shape_cast %27 : vector<2x128xf32> to vector<1x2x128xf32>
    %29 = vector.broadcast %28 : vector<1x2x128xf32> to vector<4x2x128xf32>
    %30 = arith.mulf %1, %29 : vector<4x2x128xf32>
    %c0_3 = arith.constant 0 : index
    %c0_4 = arith.constant 0 : index
    %c0_5 = arith.constant 0 : index
    %c0_6 = arith.constant 0 : index
    %31 = vector.load %arg3[%c0_3, %c0_4, %c0_5, %c0_6] : memref<1x4x2x128xf32, #tpu.memory_space<vmem>>, vector<1x4x2x128xf32>
    %32 = vector.shape_cast %31 : vector<1x4x2x128xf32> to vector<4x2x128xf32>
    %33 = vector.shape_cast %30 : vector<4x2x128xf32> to vector<1x4x2x128xf32>
    tpu.vector_store %arg3[%c0_3, %c0_4, %c0_5, %c0_6], %33 {strides = array<i32>} : memref<1x4x2x128xf32, #tpu.memory_space<vmem>>, vector<1x4x2x128xf32>,
    return
  }
  func.func @transform_0(%arg0: i32, %arg1: i32) -> (i32, i32, i32, i32) {
    %c0_i32 = arith.constant 0 : i32
    %c0_i32_0 = arith.constant 0 : i32
    %c0_i32_1 = arith.constant 0 : i32
    return %arg0, %c0_i32, %arg1, %c0_i32_0 : i32, i32, i32, i32
  }
  func.func @transform_1(%arg0: i32, %arg1: i32) -> (i32, i32, i32, i32) {
    %c0_i32 = arith.constant 0 : i32
    %c0_i32_0 = arith.constant 0 : i32
    %c0_i32_1 = arith.constant 0 : i32
    return %arg0, %c0_i32, %arg1, %c0_i32_0 : i32, i32, i32, i32
  }
}

</mosaic_0001>

<llo_original>
// kernel: tpu_custom_call.1
$region0: #{tpu_custom_call.1}
  #allocation0 [shape = 'u32[]', space=smem, size = 0x4, offset = 0x4, fixed_abs, tag = 'smem constant byte address 0x4 - core index']
  #allocation1 [shape = 'u32[144,128]{1,0:T(1,128)}', space=vmem, size = 0x12000, scoped, tag = 'internal scratch']
  %s0 = inlined_call_operand.hbm [shape: f32[2,4,2,128], index: 0, kind: input, shape index: {}]
  %s1 = inlined_call_operand.hbm [shape: f32[2,4,2,128], index: 1, kind: output, shape index: {}]
  %s2 = sld [smem:[#allocation0]]
  $region41: #{tpu_custom_call.1} parent=0
    _
  %s4 = ssub.s32 1, %s2
  %s5 = scalar_select 0, %s4, %s2
  $region1: #{tpu_custom_call.1} parent=0
    #allocation2 [shape = 'u8[8192]{0}', space=vmem, size = 0x2000, scoped, tag = 'input window, operand 0']
    #allocation3 [shape = 's32[2]{0}', space=sflag, size = 0x8, scoped, tag = 'scoped memory for tpu_custom_call.1']
    #allocation4 [shape = 's32[2]{0}', space=sflag, size = 0x8, scoped, tag = 'scoped memory for tpu_custom_call.1']
    #allocation5 [shape = 'u8[8192]{0}', space=vmem, size = 0x2000, scoped, tag = 'output window, operand 0']
    %6 = vsyncpa [#allocation3], 0
    %s7 = scalar_lea.sflag [#allocation3], 1
    %8 = vsyncpa %s7, 0
    %9 = vsyncpa [#allocation4], 0
    %s10 = scalar_lea.sflag [#allocation4], 1
    %11 = vsyncpa %s10, 0
    loop: start=0, step=1, limit=4
    $region2: #{tpu_custom_call.1} parent=1 // loop_pre_header
      _
    $region3: #{tpu_custom_call.1} parent=1 // loop_header
      %s13 = sphi 0, %s17
      %p14 = scmp.ge.s32.totalorder %s13, 4
      %s20 = sphi 0, %s32
      %s21 = sphi 0, %s28
      %s22 = sphi 0, %s20
      %s23 = sphi 0, %s21
      %s24 = sphi 0, %s22
      %s25 = sphi 0, %s23
      %s37 = sphi 0, %s39
      %s40 = sphi 0, %s37
      %s41 = sphi 0, %s40
      %s57 = sphi 0, %s41
      %s65 = sphi 0, %s67
      %s68 = sphi 0, %s65
      %s69 = sphi 0, %s68
      %s85 = sphi 0, %s69
    $region4: #{tpu_custom_call.1} parent=1 // loop_header_branch
      %16 = sbr.rel (%p14) target = $region8
    $region5: #{tpu_custom_call.1} parent=1 // loop_body
      %s18 = ssub.s32 %s13, 1
      %s19 = ssub.s32 %s13, 2
      %s26 = sadd.s32 1, %s21
      %p27 = scmp.ge.s32.totalorder %s26, 1
      %s28 = scalar_select %p27, 0, %s26
      %s29 = sadd.s32 1, %s20
      %s30 = scalar_select %p27, %s29, %s20
      %p31 = scmp.ge.s32.totalorder %s30, 2
      %s32 = scalar_select %p31, 0, %s30
      %s33 = ssub.s32 %s20, %s32
      %s34 = ssub.s32 %s21, %s28
      %s35 = sor.u32 %s33, %s34
      %p36 = scmp.eq.s32.totalorder %s35, 0
      %s38 = sadd.s32 %s37, 1
      %s39 = scalar_select %p36, %s37, %s38
      %p42 = pneg %p36
      %p43 = scmp.eq.s32.totalorder %s13, 1
      %p44 = por %p42, %p43
      %p45 = scmp.ne.s32.totalorder %s37, %s40
      %p46 = scmp.eq.s32.totalorder %s13, 0
      %p47 = por %p45, %p46
      %p48 = scmp.ne.s32.totalorder %s37, %s40
      %p49 = scmp.eq.s32.totalorder %s18, 1
      %p50 = por %p48, %p49
      %p51 = scmp.ne.s32.totalorder %s40, %s41
      %p52 = scmp.eq.s32.totalorder %s18, 0
      %p53 = por %p51, %p52
      %p54 = scmp.ne.s32.totalorder %s40, %s41
      %p55 = scmp.eq.s32.totalorder %s19, 1
      %p56 = por %p54, %p55
      %p58 = scmp.ne.s32.totalorder %s41, %s57
      %p59 = scmp.eq.s32.totalorder %s19, 0
      %p60 = por %p58, %p59
      %s61 = ssub.s32 %s20, %s32
      %s62 = ssub.s32 %s21, %s28
      %s63 = sor.u32 %s61, %s62
      %p64 = scmp.eq.s32.totalorder %s63, 0
      %s66 = sadd.s32 %s65, 1
      %s67 = scalar_select %p64, %s65, %s66
      %p70 = pneg %p64
      %p71 = scmp.eq.s32.totalorder %s13, 1
      %p72 = por %p70, %p71
      %p73 = scmp.ne.s32.totalorder %s65, %s68
      %p74 = scmp.eq.s32.totalorder %s13, 0
      %p75 = por %p73, %p74
      %p76 = scmp.ne.s32.totalorder %s65, %s68
      %p77 = scmp.eq.s32.totalorder %s18, 1
      %p78 = por %p76, %p77
      %p79 = scmp.ne.s32.totalorder %s68, %s69
      %p80 = scmp.eq.s32.totalorder %s18, 0
      %p81 = por %p79, %p80
      %p82 = scmp.ne.s32.totalorder %s68, %s69
      %p83 = scmp.eq.s32.totalorder %s19, 1
      %p84 = por %p82, %p83
      %p86 = scmp.ne.s32.totalorder %s69, %s85
      %p87 = scmp.eq.s32.totalorder %s19, 0
      %p88 = por %p86, %p87
      %p89 = scmp.le.s32.totalorder 1, %s13
      %p90 = scmp.lt.s32.totalorder %s13, 3
      %p91 = pnand %p89, %p90
      %p92 = pneg %p91
      // Predicated region
      $region9: #{tpu_custom_call.1} parent=5 // pred_check
        _
      $region10: #{tpu_custom_call.1} parent=5 // pred_check_branch
        %94 = sbr.rel (%p91) target = $region12
      $region11: #{tpu_custom_call.1} parent=5 // pred_region
        %s95 = ssub.s32 %s13, 1
      $region12: #{tpu_custom_call.1} parent=5 // pred_fallthru
        _
      %p96 = scmp.lt.s32.totalorder %s13, 2
      // Predicated region
      $region13: #{tpu_custom_call.1} parent=5 // pred_check
        %p97 = pneg %p96
      $region14: #{tpu_custom_call.1} parent=5 // pred_check_branch
        %99 = sbr.rel (%p97) target = $region16
      $region15: #{tpu_custom_call.1} parent=5 // pred_region
        // Predicated region
        $region17: #{tpu_custom_call.1} parent=15 // pred_check
          %p100 = pneg %p47
        $region18: #{tpu_custom_call.1} parent=15 // pred_check_branch
          %102 = sbr.rel (%p100) target = $region20
        $region19: #{tpu_custom_call.1} parent=15 // pred_region
          %s103 = sand.u32 %s37, 1
          %s104 = scalar_lea.sflag [#allocation3], %s103
          %s105 = sand.u32 %s37, 1
          %s106 = smul.addr %s105, 8
          %s107 = scalar_lea.vmem [#allocation2], %s106
          %s109 = ssub.s32 128, 128
          %110 = vsyncadd %s104, %s109
          %s111 = smul.addr %s20, 4
          %s112 = sadd.s32 %s21, %s111
          %s113 = smul.addr %s112, 32
          %s114 = scalar_lea.hbm %s0, %s113
          %s115 = sshll.u32 %s107, 4
          %s116 = int_to_ptr.vmem [resolvable:$true] %s115
          %121 = dma.hbm_to_vmem [thread:$0]  %s114, 128, %s116, %s104, 32, 32, 2
        $region20: #{tpu_custom_call.1} parent=15 // pred_fallthru
          _
      $region16: #{tpu_custom_call.1} parent=5 // pred_fallthru
        _
      %p122 = scmp.le.s32.totalorder 1, %s13
      %p123 = scmp.lt.s32.totalorder %s13, 3
      %p124 = pnand %p122, %p123
      %p125 = pneg %p124
      // Predicated region
      $region21: #{tpu_custom_call.1} parent=5 // pred_check
        _
      $region22: #{tpu_custom_call.1} parent=5 // pred_check_branch
        %127 = sbr.rel (%p124) target = $region24
      $region23: #{tpu_custom_call.1} parent=5 // pred_region
        %s128 = ssub.s32 %s13, 1
        %s129 = sand.u32 %s40, 1
        %s130 = scalar_lea.sflag [#allocation3], %s129
        %s131 = sand.u32 %s40, 1
        %s132 = smul.addr %s131, 8
        %s133 = scalar_lea.vmem [#allocation2], %s132
        // Predicated region
        $region25: #{tpu_custom_call.1} parent=23 // pred_check
          %p134 = pneg %p53
        $region26: #{tpu_custom_call.1} parent=23 // pred_check_branch
          %136 = sbr.rel (%p134) target = $region28
        $region27: #{tpu_custom_call.1} parent=23 // pred_region
          %137 = dma.done %s130, 128
        $region28: #{tpu_custom_call.1} parent=23 // pred_fallthru
          _
        %s138 = sand.u32 %s40, 1
        %s139 = scalar_lea.sflag [#allocation3], %s138
        %s140 = sand.u32 %s40, 1
        %s141 = smul.addr %s140, 8
        %s142 = scalar_lea.vmem [#allocation2], %s141
        %p143 = pneg %p53
        %p144 = pneg %p50
        %p145 = pneg %p81
        %p146 = pneg %p78
        %s147 = sand.u32 %s68, 1
        %s148 = scalar_lea.sflag [#allocation4], %s147
        %s149 = sand.u32 %s68, 1
        %s150 = smul.addr %s149, 8
        %s151 = scalar_lea.vmem [#allocation5], %s150
        %v152 = vld [vmem:[%s133] sm:$0x3]
        %v153 = vld [vmem:[%s133 + $0x2] sm:$0x3]
        %v154 = vld [vmem:[%s133 + $0x4] sm:$0x3]
        %v155 = vld [vmem:[%s133 + $0x6] sm:$0x3]
        %v156 = vmul.f32 %v152, %v152
        %v157 = vmul.f32 %v153, %v153
        %v158 = vadd.f32 %v156, %v157
        %v159 = vmul.f32 %v154, %v154
        %v160 = vadd.f32 %v158, %v159
        %v161 = vmul.f32 %v155, %v155
        %v162 = vadd.f32 %v160, %v161
        %v163 = vadd.f32 %v162, 1e-24
        %v164 = vrsqrt.pop %v163
        %v165 = vmul.f32 %v152, %v164
        %v166 = vmul.f32 %v153, %v164
        %v167 = vmul.f32 %v154, %v164
        %v168 = vmul.f32 %v155, %v164
        %169 = vst [vmem:[%s151] sm:$0x3] %v165
        %170 = vst [vmem:[%s151 + $0x2] sm:$0x3] %v166
        %171 = vst [vmem:[%s151 + $0x4] sm:$0x3] %v167
        %172 = vst [vmem:[%s151 + $0x6] sm:$0x3] %v168
        %s173 = sand.u32 %s68, 1
        %s174 = scalar_lea.sflag [#allocation4], %s173
        %s175 = sand.u32 %s68, 1
        %s176 = smul.addr %s175, 8
        %s177 = scalar_lea.vmem [#allocation5], %s176
        // Predicated region
        $region29: #{tpu_custom_call.1} parent=23 // pred_check
          %p178 = pneg %p78
        $region30: #{tpu_custom_call.1} parent=23 // pred_check_branch
          %180 = sbr.rel (%p178) target = $region32
        $region31: #{tpu_custom_call.1} parent=23 // pred_region
          %s182 = ssub.s32 128, 128
          %183 = vsyncadd %s174, %s182
          %s184 = smul.addr %s22, 4
          %s185 = sadd.s32 %s23, %s184
          %s186 = smul.addr %s185, 32
          %s187 = scalar_lea.hbm %s1, %s186
          %s188 = sshll.u32 %s177, 4
          %s189 = int_to_ptr.vmem [resolvable:$true] %s188
          %194 = dma.vmem_to_hbm [thread:$0]  %s189, 128, %s187, %s174, 32, 32, 2
        $region32: #{tpu_custom_call.1} parent=23 // pred_fallthru
          _
      $region24: #{tpu_custom_call.1} parent=5 // pred_fallthru
        _
      %p195 = scmp.le.s32.totalorder 2, %s13
      // Predicated region
      $region33: #{tpu_custom_call.1} parent=5 // pred_check
        %p196 = pneg %p195
      $region34: #{tpu_custom_call.1} parent=5 // pred_check_branch
        %198 = sbr.rel (%p196) target = $region36
      $region35: #{tpu_custom_call.1} parent=5 // pred_region
        %s199 = ssub.s32 %s13, 2
        // Predicated region
        $region37: #{tpu_custom_call.1} parent=35 // pred_check
          %p200 = pneg %p84
        $region38: #{tpu_custom_call.1} parent=35 // pred_check_branch
          %202 = sbr.rel (%p200) target = $region40
        $region39: #{tpu_custom_call.1} parent=35 // pred_region
          %s203 = sand.u32 %s69, 1
          %s204 = scalar_lea.sflag [#allocation4], %s203
          %s205 = sand.u32 %s69, 1
          %s206 = smul.addr %s205, 8
          %s207 = scalar_lea.vmem [#allocation5], %s206
          %208 = dma.done %s204, 128
        $region40: #{tpu_custom_call.1} parent=35 // pred_fallthru
          _
      $region36: #{tpu_custom_call.1} parent=5 // pred_fallthru
        _
    $region6: #{tpu_custom_call.1} parent=1 // loop_footer
      %s17 = sadd.s32 1, %s13
    $region7: #{tpu_custom_call.1} parent=1 // loop_footer_branch
      %12 = sbr.rel target = $region3
    $region8: #{tpu_custom_call.1} parent=1 // loop_exit
      _
    %209 = vsyncpa [#allocation3], 1
    %s210 = scalar_lea.sflag [#allocation3], 1
    %211 = vsyncpa %s210, 1
    %212 = vsyncpa [#allocation4], 1
    %s213 = scalar_lea.sflag [#allocation4], 1
    %214 = vsyncpa %s213, 1

</llo_original>
